<compile_context>
chip_gen: v5e
topology: v5e:2x2
jax: 0.10.0
libtpu: 0.0.40
codegen_flags: <defaults>
</compile_context>

<pallas_src>
import jax
import jax.numpy as jnp
import numpy as np
from jax.experimental import pallas as pl
from jax.experimental.pallas import tpu as pltpu


# ----------------------------------------------------------------------------------
# Pallas kernel: one batch element per grid step.
#   x_ref   : (H+2, W*Cin)        bf16, rows zero-padded top/bottom
#   w1_ref  : (3, W*Cin,  W*Cout) bf16  banded conv1 weights (width padding folded in)
#   w2_ref  : (3, W*Cout, Wo*Cout)bf16  banded conv2 weights with width avg-pool folded
#   m3_ref  : (W*Cin, Wo*Cout)    f32   width avg-pool fused with 1x1 shortcut conv
#   ph_ref  : (Ho, H)             f32   row avg-pool (main path)
#   php_ref : (Ho, H+2)           f32   row avg-pool acting on padded rows (shortcut)
#   b1_ref  : (1, W*Cout)         f32   lane-tiled conv1 bias
#   b2_ref  : (1, Wo*Cout)        f32   pooled conv2 bias
#   b3_ref  : (1, Wo*Cout)        f32   lane-tiled shortcut bias
#   out_ref : (Ho, Wo*Cout)       f32
# ----------------------------------------------------------------------------------
def optimized_block_kernel(x_ref, w1_ref, w2_ref, m3_ref, ph_ref, php_ref,
                           b1_ref, b2_ref, b3_ref, out_ref):
    f32 = jnp.float32
    Hp = x_ref.shape[0]
    H = Hp - 2
    WCout = w1_ref.shape[-1]      # W * Cout
    WoCout = w2_ref.shape[-1]     # Wo * Cout

    # ---- conv1 (3x3, "same") as 3 banded matmuls, K = W*Cin -----------------------
    acc1 = jnp.zeros((H, WCout), f32)
    for dy in range(3):
        acc1 = acc1 + jnp.dot(x_ref[dy:dy + H, :], w1_ref[dy],
                              preferred_element_type=f32)
    h1 = jnp.maximum(acc1 + b1_ref[...], 0.0)                   # (H, W*Cout) f32

    # Row padding for conv2 (width padding already folded into w2 band structure).
    zrow = jnp.zeros((1, WCout), jnp.bfloat16)
    h1p = jnp.concatenate([zrow, h1.astype(jnp.bfloat16), zrow], axis=0)  # (H+2, W*Cout)

    # ---- conv2 (3x3, "same") with the width avg-pool folded into the weights ------
    #      K = W*Cout, N = Wo*Cout  (half the width of an unfused conv2)
    acc2 = jnp.zeros((H, WoCout), f32)
    for dy in range(3):
        acc2 = acc2 + jnp.dot(h1p[dy:dy + H, :], w2_ref[dy],
                              preferred_element_type=f32)

    # ---- main path: row avg-pool via P_h, then add the (pool-invariant) bias ------
    m = jnp.dot(ph_ref[...], acc2, preferred_element_type=f32) + b2_ref[...]

    # ---- shortcut: avg-pool 2x2 then 1x1 conv (width-pool + W3 folded into M3) ----
    xr = jnp.dot(php_ref[...], x_ref[...].astype(f32),
                 preferred_element_type=f32)                    # (Ho, W*Cin)
    s = jnp.dot(xr, m3_ref[...], preferred_element_type=f32) + b3_ref[...]

    out_ref[...] = (m + s).astype(out_ref.dtype)


# ----------------------------------------------------------------------------------
# Wrapper: NCHW in / NCHW out (matches PyTorch module forward).
# ----------------------------------------------------------------------------------
def optimized_block_forward(x_nchw, operands):
    (w1b, w2bp, m3, ph, php, b1r, b2p, b3r) = operands
    B, Cin, H, W = x_nchw.shape
    assert H % 2 == 0 and W % 2 == 0, "avg-pool 2x2 requires even spatial dims"
    Cout = w1b.shape[-1] // W
    Ho, Wo = H // 2, W // 2

    # NCHW -> (B, H, W*Cin), pad one zero row top/bottom, bf16 for the MXU operands.
    x_nhwc = jnp.transpose(x_nchw, (0, 2, 3, 1)).astype(jnp.float32)
    xr = x_nhwc.reshape(B, H, W * Cin)
    xrp = jnp.pad(xr, ((0, 0), (1, 1), (0, 0))).astype(jnp.bfloat16)   # (B, H+2, W*Cin)

    out = pl.pallas_call(
        optimized_block_kernel,
        out_shape=jax.ShapeDtypeStruct((B, Ho, Wo * Cout), jnp.float32),
        grid_spec=pltpu.PrefetchScalarGridSpec(
            num_scalar_prefetch=0,
            grid=(B,),
            in_specs=[
                pl.BlockSpec((None, H + 2, W * Cin), lambda b: (b, 0, 0)),
                pl.BlockSpec((3, W * Cin, W * Cout), lambda b: (0, 0, 0)),
                pl.BlockSpec((3, W * Cout, Wo * Cout), lambda b: (0, 0, 0)),
                pl.BlockSpec((W * Cin, Wo * Cout), lambda b: (0, 0)),
                pl.BlockSpec((Ho, H), lambda b: (0, 0)),
                pl.BlockSpec((Ho, H + 2), lambda b: (0, 0)),
                pl.BlockSpec((1, W * Cout), lambda b: (0, 0)),
                pl.BlockSpec((1, Wo * Cout), lambda b: (0, 0)),
                pl.BlockSpec((1, Wo * Cout), lambda b: (0, 0)),
            ],
            out_specs=pl.BlockSpec((None, Ho, Wo * Cout), lambda b: (b, 0, 0)),
        ),
        compiler_params=pltpu.CompilerParams(
            dimension_semantics=("parallel",)),   # batch elements independent -> megacore
    )(xrp, w1b, w2bp, m3, ph, php, b1r, b2p, b3r)

    out = out.reshape(B, Ho, Wo, Cout)
    return jnp.transpose(out, (0, 3, 1, 2))                            # NCHW


# ----------------------------------------------------------------------------------
# Parameter prep (deterministic) + spectral normalization (glue, outside the kernel).
# ----------------------------------------------------------------------------------
def spectral_normalize(w_oihw, u):
    """One power-iteration spectral norm, like torch spectral_norm's forward."""
    o = w_oihw.shape[0]
    w_mat = w_oihw.reshape(o, -1)
    l2n = lambda v: v / (jnp.linalg.norm(v) + 1e-12)
    u = l2n(u)
    v = l2n(w_mat.T @ u)
    u = l2n(w_mat @ v)
    sigma = u @ (w_mat @ v)
    return w_oihw / sigma


def init_params(key, cin, cout):
    ks = jax.random.split(key, 9)

    def conv_init(k, shape):
        fan_in = shape[1] * shape[2] * shape[3]
        bound = 1.0 / np.sqrt(fan_in)
        return jax.random.uniform(k, shape, jnp.float32, -bound, bound)

    w1 = conv_init(ks[0], (cout, cin, 3, 3))
    w2 = conv_init(ks[1], (cout, cout, 3, 3))
    w3 = conv_init(ks[2], (cout, cin, 1, 1))
    b1 = jax.random.uniform(ks[3], (cout,), jnp.float32, -0.1, 0.1)
    b2 = jax.random.uniform(ks[4], (cout,), jnp.float32, -0.1, 0.1)
    b3 = jax.random.uniform(ks[5], (cout,), jnp.float32, -0.1, 0.1)

    w1 = spectral_normalize(w1, jax.random.normal(ks[6], (cout,)))
    w2 = spectral_normalize(w2, jax.random.normal(ks[7], (cout,)))
    w3 = spectral_normalize(w3, jax.random.normal(ks[8], (cout,)))
    return w1, w2, w3, b1, b2, b3


def build_kernel_operands(w1, w2, w3, b1, b2, b3, H, W):
    """Host-side (numpy) construction of banded conv weights and pooling matrices."""
    w1 = np.asarray(w1); w2 = np.asarray(w2); w3 = np.asarray(w3)
    b1 = np.asarray(b1); b2 = np.asarray(b2); b3 = np.asarray(b3)
    Cout, Cin = w1.shape[0], w1.shape[1]
    Ho, Wo = H // 2, W // 2

    def banded(w, cin):
        # (Cout, cin, 3, 3) -> (3, W*cin, W*Cout); "same" width padding folded in.
        out = np.zeros((3, W * cin, W * Cout), np.float32)
        for dy in range(3):
            for dx in range(3):
                tap = w[:, :, dy, dx].T                          # (cin, Cout)
                for wc in range(W):
                    wi = wc + dx - 1
                    if 0 <= wi < W:
                        out[dy, wi * cin:(wi + 1) * cin,
                            wc * Cout:(wc + 1) * Cout] = tap
        return out

    w1b = banded(w1, Cin)                                        # (3, W*Cin,  W*Cout)
    w2b = banded(w2, Cout)                                       # (3, W*Cout, W*Cout)

    # Width avg-pool (channel-group aware) folded into the conv2 banded weights.
    pw = np.zeros((W * Cout, Wo * Cout), np.float32)
    for j in range(Wo):
        for r in range(2):
            for c in range(Cout):
                pw[(2 * j + r) * Cout + c, j * Cout + c] = 0.5
    w2bp = np.einsum('dkc,cn->dkn', w2b, pw)                     # (3, W*Cout, Wo*Cout)

    # shortcut: width avg-pool (factor 2) fused with the 1x1 conv
    m3 = np.zeros((W * Cin, Wo * Cout), np.float32)
    w3m = w3.reshape(Cout, Cin).T                                # (Cin, Cout)
    for j in range(Wo):
        for r in range(2):
            m3[(2 * j + r) * Cin:(2 * j + r + 1) * Cin,
               j * Cout:(j + 1) * Cout] = 0.5 * w3m

    # row avg-pool matrices (php acts on the row-padded input: data rows 1..H)
    ph = np.zeros((Ho, H), np.float32)
    php = np.zeros((Ho, H + 2), np.float32)
    for i in range(Ho):
        ph[i, 2 * i] = ph[i, 2 * i + 1] = 0.5
        php[i, 2 * i + 1] = php[i, 2 * i + 2] = 0.5

    b1r = np.tile(b1, W).reshape(1, W * Cout)
    # avg-pool of a per-channel constant bias is the bias itself -> just tile over Wo.
    b2p = np.tile(b2, Wo).reshape(1, Wo * Cout)
    b3r = np.tile(b3, Wo).reshape(1, Wo * Cout)

    return (jnp.asarray(w1b, jnp.bfloat16), jnp.asarray(w2bp, jnp.bfloat16),
            jnp.asarray(m3), jnp.asarray(ph), jnp.asarray(php),
            jnp.asarray(b1r), jnp.asarray(b2p), jnp.asarray(b3r))


# ----------------------------------------------------------------------------------
# Plain-JAX reference (f32) for the correctness check.
# ----------------------------------------------------------------------------------
def reference_forward(x, w1, w2, w3, b1, b2, b3):
    def conv(h, w, b, pad):
        y = jax.lax.conv_general_dilated(
            h, w, (1, 1), [(pad, pad), (pad, pad)],
            dimension_numbers=("NCHW", "OIHW", "NCHW"))
        return y + b[None, :, None, None]

    def avgpool(h):
        B, C, H, W = h.shape
        return h.reshape(B, C, H // 2, 2, W // 2, 2).mean(axis=(3, 5))

    h = jax.nn.relu(conv(x, w1, b1, 1))
    h = conv(h, w2, b2, 1)
    h = avgpool(h)
    s = conv(avgpool(x), w3, b3, 0)
    return s + h


if __name__ == "__main__":
    key = jax.random.PRNGKey(0)
    B, Cin, H, W = 2, 4, 16, 16
    Cout = 8

    kx, kp = jax.random.split(key)
    x = jax.random.normal(kx, (B, Cin, H, W), jnp.float32)       # NCHW like PyTorch

    w1, w2, w3, b1, b2, b3 = init_params(kp, Cin, Cout)
    operands = build_kernel_operands(w1, w2, w3, b1, b2, b3, H, W)

    y = optimized_block_forward(x, operands)
    y = jax.block_until_ready(y)
    assert y.shape == (B, Cout, H // 2, W // 2)

    y_ref = jax.block_until_ready(reference_forward(x, w1, w2, w3, b1, b2, b3))
    max_err = float(jnp.max(jnp.abs(y - y_ref)))
    # bf16 MXU operands (f32 accumulation) vs. an all-f32 reference.
    assert max_err < 5e-2, f"mismatch vs reference: {max_err}"

    print("KERNEL_OK")
</pallas_src>

<mosaic_0001>
module attributes {stable_mosaic.version = 11 : i64} {
  func.func @optimized_block_kernel(%arg0: i32, %arg1: memref<1x18x64xbf16, #tpu.memory_space<vmem>>, %arg2: memref<3x64x128xbf16, #tpu.memory_space<vmem>>, %arg3: memref<3x128x64xbf16, #tpu.memory_space<vmem>>, %arg4: memref<64x64xf32, #tpu.memory_space<vmem>>, %arg5: memref<8x16xf32, #tpu.memory_space<vmem>>, %arg6: memref<8x18xf32, #tpu.memory_space<vmem>>, %arg7: memref<1x128xf32, #tpu.memory_space<vmem>>, %arg8: memref<1x64xf32, #tpu.memory_space<vmem>>, %arg9: memref<1x64xf32, #tpu.memory_space<vmem>>, %arg10: memref<1x8x64xf32, #tpu.memory_space<vmem>>) attributes {dimension_semantics = [#tpu.dimension_semantics<parallel>], iteration_bounds = array<i64: 2>, scalar_prefetch = 0 : i64, scratch_operands = 0 : i64, tpu.core_type = #tpu.core_type<tc>, window_params = [{transform_indices = @transform_0, window_bounds = array<i64: 1, 18, 64>}, {pipeline_mode = #tpu.pipeline_mode<synchronous>, transform_indices = @transform_1, window_bounds = array<i64: 3, 64, 128>}, {pipeline_mode = #tpu.pipeline_mode<synchronous>, transform_indices = @transform_2, window_bounds = array<i64: 3, 128, 64>}, {pipeline_mode = #tpu.pipeline_mode<synchronous>, transform_indices = @transform_3, window_bounds = array<i64: 64, 64>}, {pipeline_mode = #tpu.pipeline_mode<synchronous>, transform_indices = @transform_4, window_bounds = array<i64: 8, 16>}, {pipeline_mode = #tpu.pipeline_mode<synchronous>, transform_indices = @transform_5, window_bounds = array<i64: 8, 18>}, {pipeline_mode = #tpu.pipeline_mode<synchronous>, transform_indices = @transform_6, window_bounds = array<i64: 1, 128>}, {pipeline_mode = #tpu.pipeline_mode<synchronous>, transform_indices = @transform_7, window_bounds = array<i64: 1, 64>}, {pipeline_mode = #tpu.pipeline_mode<synchronous>, transform_indices = @transform_8, window_bounds = array<i64: 1, 64>}, {transform_indices = @transform_9, window_bounds = array<i64: 1, 8, 64>}]} {
    %cst = arith.constant 0.000000e+00 : f32
    %0 = vector.broadcast %cst : f32 to vector<16x128xf32>
    %c0 = arith.constant 0 : index
    %c0_0 = arith.constant 0 : index
    %c0_1 = arith.constant 0 : index
    %1 = vector.load %arg1[%c0, %c0_0, %c0_1] : memref<1x18x64xbf16, #tpu.memory_space<vmem>>, vector<1x16x64xbf16>
    %2 = vector.shape_cast %1 : vector<1x16x64xbf16> to vector<16x64xbf16>
    %c0_2 = arith.constant 0 : index
    %c0_3 = arith.constant 0 : index
    %c0_4 = arith.constant 0 : index
    %3 = vector.load %arg2[%c0_2, %c0_3, %c0_4] : memref<3x64x128xbf16, #tpu.memory_space<vmem>>, vector<1x64x128xbf16>
    %4 = vector.shape_cast %3 : vector<1x64x128xbf16> to vector<64x128xbf16>
    %cst_5 = arith.constant dense<0.000000e+00> : vector<16x128xf32>
    %5 = tpu.matmul %2, %4, %cst_5 {dimension_numbers = #tpu.dot_dimension_numbers<[1], [0], [0], [1], [0, 0, 1, 1], [], []>} : vector<16x64xbf16>, vector<64x128xbf16>, vector<16x128xf32> -> vector<16x128xf32>
    %6 = arith.addf %0, %5 : vector<16x128xf32>
    %c0_6 = arith.constant 0 : index
    %c1 = arith.constant 1 : index
    %c0_7 = arith.constant 0 : index
    %7 = vector.load %arg1[%c0_6, %c1, %c0_7] : memref<1x18x64xbf16, #tpu.memory_space<vmem>>, vector<1x16x64xbf16>
    %8 = vector.shape_cast %7 : vector<1x16x64xbf16> to vector<16x64xbf16>
    %c1_8 = arith.constant 1 : index
    %c0_9 = arith.constant 0 : index
    %c0_10 = arith.constant 0 : index
    %9 = vector.load %arg2[%c1_8, %c0_9, %c0_10] : memref<3x64x128xbf16, #tpu.memory_space<vmem>>, vector<1x64x128xbf16>
    %10 = vector.shape_cast %9 : vector<1x64x128xbf16> to vector<64x128xbf16>
    %cst_11 = arith.constant dense<0.000000e+00> : vector<16x128xf32>
    %11 = tpu.matmul %8, %10, %cst_11 {dimension_numbers = #tpu.dot_dimension_numbers<[1], [0], [0], [1], [0, 0, 1, 1], [], []>} : vector<16x64xbf16>, vector<64x128xbf16>, vector<16x128xf32> -> vector<16x128xf32>
    %12 = arith.addf %6, %11 : vector<16x128xf32>
    %c0_12 = arith.constant 0 : index
    %c2 = arith.constant 2 : index
    %c0_13 = arith.constant 0 : index
    %13 = vector.load %arg1[%c0_12, %c2, %c0_13] : memref<1x18x64xbf16, #tpu.memory_space<vmem>>, vector<1x16x64xbf16>
    %14 = vector.shape_cast %13 : vector<1x16x64xbf16> to vector<16x64xbf16>
    %c2_14 = arith.constant 2 : index
    %c0_15 = arith.constant 0 : index
    %c0_16 = arith.constant 0 : index
    %15 = vector.load %arg2[%c2_14, %c0_15, %c0_16] : memref<3x64x128xbf16, #tpu.memory_space<vmem>>, vector<1x64x128xbf16>
    %16 = vector.shape_cast %15 : vector<1x64x128xbf16> to vector<64x128xbf16>
    %cst_17 = arith.constant dense<0.000000e+00> : vector<16x128xf32>
    %17 = tpu.matmul %14, %16, %cst_17 {dimension_numbers = #tpu.dot_dimension_numbers<[1], [0], [0], [1], [0, 0, 1, 1], [], []>} : vector<16x64xbf16>, vector<64x128xbf16>, vector<16x128xf32> -> vector<16x128xf32>
    %18 = arith.addf %12, %17 : vector<16x128xf32>
    %c0_18 = arith.constant 0 : index
    %c0_19 = arith.constant 0 : index
    %19 = vector.load %arg7[%c0_18, %c0_19] : memref<1x128xf32, #tpu.memory_space<vmem>>, vector<1x128xf32>
    %20 = vector.broadcast %19 : vector<1x128xf32> to vector<16x128xf32>
    %21 = arith.addf %18, %20 : vector<16x128xf32>
    %cst_20 = arith.constant 0.000000e+00 : f32
    %22 = vector.broadcast %cst_20 : f32 to vector<16x128xf32>
    %23 = arith.maximumf %21, %22 : vector<16x128xf32>
    %cst_21 = arith.constant 0.000000e+00 : bf16
    %24 = vector.broadcast %cst_21 : bf16 to vector<1x128xbf16>
    %25 = arith.truncf %23 : vector<16x128xf32> to vector<16x128xbf16>
    %26 = tpu.concatenate %24, %25, %24 in 0 : vector<1x128xbf16>, vector<16x128xbf16>, vector<1x128xbf16> -> vector<18x128xbf16>
    %cst_22 = arith.constant 0.000000e+00 : f32
    %27 = vector.broadcast %cst_22 : f32 to vector<16x64xf32>
    %28 = vector.extract_strided_slice %26 {offsets = [0, 0], sizes = [16, 128], strides = [1, 1]} : vector<18x128xbf16> to vector<16x128xbf16>
    %c0_23 = arith.constant 0 : index
    %c0_24 = arith.constant 0 : index
    %c0_25 = arith.constant 0 : index
    %29 = vector.load %arg3[%c0_23, %c0_24, %c0_25] : memref<3x128x64xbf16, #tpu.memory_space<vmem>>, vector<1x128x64xbf16>
    %30 = vector.shape_cast %29 : vector<1x128x64xbf16> to vector<128x64xbf16>
    %cst_26 = arith.constant dense<0.000000e+00> : vector<16x64xf32>
    %31 = tpu.matmul %28, %30, %cst_26 {dimension_numbers = #tpu.dot_dimension_numbers<[1], [0], [0], [1], [0, 0, 1, 1], [], []>} : vector<16x128xbf16>, vector<128x64xbf16>, vector<16x64xf32> -> vector<16x64xf32>
    %32 = arith.addf %27, %31 : vector<16x64xf32>
    %33 = vector.extract_strided_slice %26 {offsets = [1, 0], sizes = [16, 128], strides = [1, 1]} : vector<18x128xbf16> to vector<16x128xbf16>
    %c1_27 = arith.constant 1 : index
    %c0_28 = arith.constant 0 : index
    %c0_29 = arith.constant 0 : index
    %34 = vector.load %arg3[%c1_27, %c0_28, %c0_29] : memref<3x128x64xbf16, #tpu.memory_space<vmem>>, vector<1x128x64xbf16>
    %35 = vector.shape_cast %34 : vector<1x128x64xbf16> to vector<128x64xbf16>
    %cst_30 = arith.constant dense<0.000000e+00> : vector<16x64xf32>
    %36 = tpu.matmul %33, %35, %cst_30 {dimension_numbers = #tpu.dot_dimension_numbers<[1], [0], [0], [1], [0, 0, 1, 1], [], []>} : vector<16x128xbf16>, vector<128x64xbf16>, vector<16x64xf32> -> vector<16x64xf32>
    %37 = arith.addf %32, %36 : vector<16x64xf32>
    %38 = vector.extract_strided_slice %26 {offsets = [2, 0], sizes = [16, 128], strides = [1, 1]} : vector<18x128xbf16> to vector<16x128xbf16>
    %c2_31 = arith.constant 2 : index
    %c0_32 = arith.constant 0 : index
    %c0_33 = arith.constant 0 : index
    %39 = vector.load %arg3[%c2_31, %c0_32, %c0_33] : memref<3x128x64xbf16, #tpu.memory_space<vmem>>, vector<1x128x64xbf16>
    %40 = vector.shape_cast %39 : vector<1x128x64xbf16> to vector<128x64xbf16>
    %cst_34 = arith.constant dense<0.000000e+00> : vector<16x64xf32>
    %41 = tpu.matmul %38, %40, %cst_34 {dimension_numbers = #tpu.dot_dimension_numbers<[1], [0], [0], [1], [0, 0, 1, 1], [], []>} : vector<16x128xbf16>, vector<128x64xbf16>, vector<16x64xf32> -> vector<16x64xf32>
    %42 = arith.addf %37, %41 : vector<16x64xf32>
    %c0_35 = arith.constant 0 : index
    %c0_36 = arith.constant 0 : index
    %43 = vector.load %arg5[%c0_35, %c0_36] : memref<8x16xf32, #tpu.memory_space<vmem>>, vector<8x16xf32>
    %cst_37 = arith.constant dense<0.000000e+00> : vector<8x64xf32>
    %44 = tpu.matmul %43, %42, %cst_37 {dimension_numbers = #tpu.dot_dimension_numbers<[1], [0], [0], [1], [0, 0, 1, 1], [], []>} : vector<8x16xf32>, vector<16x64xf32>, vector<8x64xf32> -> vector<8x64xf32>
    %c0_38 = arith.constant 0 : index
    %c0_39 = arith.constant 0 : index
    %45 = vector.load %arg8[%c0_38, %c0_39] : memref<1x64xf32, #tpu.memory_space<vmem>>, vector<1x64xf32>
    %46 = vector.broadcast %45 : vector<1x64xf32> to vector<8x64xf32>
    %47 = arith.addf %44, %46 : vector<8x64xf32>
    %c0_40 = arith.constant 0 : index
    %c0_41 = arith.constant 0 : index
    %48 = vector.load %arg6[%c0_40, %c0_41] : memref<8x18xf32, #tpu.memory_space<vmem>>, vector<8x18xf32>
    %c0_42 = arith.constant 0 : index
    %c0_43 = arith.constant 0 : index
    %c0_44 = arith.constant 0 : index
    %49 = vector.load %arg1[%c0_42, %c0_43, %c0_44] : memref<1x18x64xbf16, #tpu.memory_space<vmem>>, vector<1x18x64xbf16>
    %50 = vector.shape_cast %49 : vector<1x18x64xbf16> to vector<18x64xbf16>
    %51 = arith.extf %50 : vector<18x64xbf16> to vector<18x64xf32>
    %cst_45 = arith.constant dense<0.000000e+00> : vector<8x64xf32>
    %52 = tpu.matmul %48, %51, %cst_45 {dimension_numbers = #tpu.dot_dimension_numbers<[1], [0], [0], [1], [0, 0, 1, 1], [], []>} : vector<8x18xf32>, vector<18x64xf32>, vector<8x64xf32> -> vector<8x64xf32>
    %c0_46 = arith.constant 0 : index
    %c0_47 = arith.constant 0 : index
    %53 = vector.load %arg4[%c0_46, %c0_47] : memref<64x64xf32, #tpu.memory_space<vmem>>, vector<64x64xf32>
    %cst_48 = arith.constant dense<0.000000e+00> : vector<8x64xf32>
    %54 = tpu.matmul %52, %53, %cst_48 {dimension_numbers = #tpu.dot_dimension_numbers<[1], [0], [0], [1], [0, 0, 1, 1], [], []>} : vector<8x64xf32>, vector<64x64xf32>, vector<8x64xf32> -> vector<8x64xf32>
    %c0_49 = arith.constant 0 : index
    %c0_50 = arith.constant 0 : index
    %55 = vector.load %arg9[%c0_49, %c0_50] : memref<1x64xf32, #tpu.memory_space<vmem>>, vector<1x64xf32>
    %56 = vector.broadcast %55 : vector<1x64xf32> to vector<8x64xf32>
    %57 = arith.addf %54, %56 : vector<8x64xf32>
    %58 = arith.addf %47, %57 : vector<8x64xf32>
    %c0_51 = arith.constant 0 : index
    %c0_52 = arith.constant 0 : index
    %c0_53 = arith.constant 0 : index
    %59 = vector.load %arg10[%c0_51, %c0_52, %c0_53] : memref<1x8x64xf32, #tpu.memory_space<vmem>>, vector<1x8x64xf32>
    %60 = vector.shape_cast %59 : vector<1x8x64xf32> to vector<8x64xf32>
    %61 = vector.shape_cast %58 : vector<8x64xf32> to vector<1x8x64xf32>
    tpu.vector_store %arg10[%c0_51, %c0_52, %c0_53], %61 {strides = array<i32>} : memref<1x8x64xf32, #tpu.memory_space<vmem>>, vector<1x8x64xf32>,
    return
  }
  func.func @transform_0(%arg0: i32) -> (i32, i32, i32) {
    %c0_i32 = arith.constant 0 : i32
    %c0_i32_0 = arith.constant 0 : i32
    %c0_i32_1 = arith.constant 0 : i32
    return %arg0, %c0_i32, %c0_i32_0 : i32, i32, i32
  }
  func.func @transform_1(%arg0: i32) -> (i32, i32, i32) {
    %c0_i32 = arith.constant 0 : i32
    %c0_i32_0 = arith.constant 0 : i32
    %c0_i32_1 = arith.constant 0 : i32
    %c0_i32_2 = arith.constant 0 : i32
    return %c0_i32, %c0_i32_0, %c0_i32_1 : i32, i32, i32
  }
  func.func @transform_2(%arg0: i32) -> (i32, i32, i32) {
    %c0_i32 = arith.constant 0 : i32
    %c0_i32_0 = arith.constant 0 : i32
    %c0_i32_1 = arith.constant 0 : i32
    %c0_i32_2 = arith.constant 0 : i32
    return %c0_i32, %c0_i32_0, %c0_i32_1 : i32, i32, i32
  }
  func.func @transform_3(%arg0: i32) -> (i32, i32) {
    %c0_i32 = arith.constant 0 : i32
    %c0_i32_0 = arith.constant 0 : i32
    %c0_i32_1 = arith.constant 0 : i32
    return %c0_i32, %c0_i32_0 : i32, i32
  }
  func.func @transform_4(%arg0: i32) -> (i32, i32) {
    %c0_i32 = arith.constant 0 : i32
    %c0_i32_0 = arith.constant 0 : i32
    %c0_i32_1 = arith.constant 0 : i32
    return %c0_i32, %c0_i32_0 : i32, i32
  }
  func.func @transform_5(%arg0: i32) -> (i32, i32) {
    %c0_i32 = arith.constant 0 : i32
    %c0_i32_0 = arith.constant 0 : i32
    %c0_i32_1 = arith.constant 0 : i32
    return %c0_i32, %c0_i32_0 : i32, i32
  }
  func.func @transform_6(%arg0: i32) -> (i32, i32) {
    %c0_i32 = arith.constant 0 : i32
    %c0_i32_0 = arith.constant 0 : i32
    %c0_i32_1 = arith.constant 0 : i32
    return %c0_i32, %c0_i32_0 : i32, i32
  }
  func.func @transform_7(%arg0: i32) -> (i32, i32) {
    %c0_i32 = arith.constant 0 : i32
    %c0_i32_0 = arith.constant 0 : i32
    %c0_i32_1 = arith.constant 0 : i32
    return %c0_i32, %c0_i32_0 : i32, i32
  }
  func.func @transform_8(%arg0: i32) -> (i32, i32) {
    %c0_i32 = arith.constant 0 : i32
    %c0_i32_0 = arith.constant 0 : i32
    %c0_i32_1 = arith.constant 0 : i32
    return %c0_i32, %c0_i32_0 : i32, i32
  }
  func.func @transform_9(%arg0: i32) -> (i32, i32, i32) {
    %c0_i32 = arith.constant 0 : i32
    %c0_i32_0 = arith.constant 0 : i32
    %c0_i32_1 = arith.constant 0 : i32
    return %arg0, %c0_i32, %c0_i32_0 : i32, i32, i32
  }
}

</mosaic_0001>

<llo_original>
// kernel: tpu_custom_call.1
$region0: #{tpu_custom_call.1}
  #allocation0 [shape = 'u32[]', space=smem, size = 0x4, offset = 0x4, fixed_abs, tag = 'smem constant byte address 0x4 - core index']
  #allocation1 [shape = 'u32[72,128]{1,0:T(1,128)}', space=vmem, size = 0x9000, scoped, tag = 'internal scratch']
  %s0 = inlined_call_operand.vmem [shape: bf16[2,18,64], index: 0, kind: input, shape index: {}]
  %s1 = inlined_call_operand.vmem [shape: bf16[3,64,128], index: 1, kind: input, shape index: {}]
  %s2 = inlined_call_operand.vmem [shape: bf16[3,128,64], index: 2, kind: input, shape index: {}]
  %s3 = inlined_call_operand.vmem [shape: f32[64,64], index: 3, kind: input, shape index: {}]
  %s4 = inlined_call_operand.vmem [shape: f32[8,16], index: 4, kind: input, shape index: {}]
  %s5 = inlined_call_operand.vmem [shape: f32[8,18], index: 5, kind: input, shape index: {}]
  %s6 = inlined_call_operand.vmem [shape: f32[1,128], index: 6, kind: input, shape index: {}]
  %s7 = inlined_call_operand.vmem [shape: f32[1,64], index: 7, kind: input, shape index: {}]
  %s8 = inlined_call_operand.vmem [shape: f32[1,64], index: 8, kind: input, shape index: {}]
  %s9 = inlined_call_operand.hbm [shape: f32[2,8,64], index: 9, kind: output, shape index: {}]
  %s10 = sld [smem:[#allocation0]]
  $region69: #{tpu_custom_call.1} parent=0
    _
  %s12 = ssub.s32 1, %s10
  %s13 = scalar_select 0, %s12, %s10
  $region1: #{tpu_custom_call.1} parent=0
    #allocation2 [shape = 'u8[8192]{0}', space=vmem, size = 0x2000, scoped, tag = 'output window, operand 0']
    #allocation3 [shape = 's32[2]{0}', space=sflag, size = 0x8, scoped, tag = 'scoped memory for tpu_custom_call.1']
    %14 = vsyncpa [#allocation3], 0
    %s15 = scalar_lea.sflag [#allocation3], 1
    %16 = vsyncpa %s15, 0
    loop: start=0, step=1, limit=4
    $region2: #{tpu_custom_call.1} parent=1 // loop_pre_header
      _
    $region3: #{tpu_custom_call.1} parent=1 // loop_header
      %s18 = sphi 0, %s22
      %p19 = scmp.ge.s32.totalorder %s18, 4
      %s28 = sphi 0, %s30
      %s31 = sphi 0, %s28
      %s32 = sphi 0, %s31
      %s48 = sphi 0, %s32
      %s52 = sphi 0, %s52
      %s54 = sphi 0, %s52
      %s55 = sphi 0, %s54
      %s69 = sphi 0, %s55
      %s73 = sphi 0, %s73
      %s75 = sphi 0, %s73
      %s76 = sphi 0, %s75
      %s90 = sphi 0, %s76
      %s94 = sphi 0, %s94
      %s96 = sphi 0, %s94
      %s97 = sphi 0, %s96
      %s111 = sphi 0, %s97
      %s115 = sphi 0, %s115
      %s117 = sphi 0, %s115
      %s118 = sphi 0, %s117
      %s132 = sphi 0, %s118
      %s136 = sphi 0, %s136
      %s138 = sphi 0, %s136
      %s139 = sphi 0, %s138
      %s153 = sphi 0, %s139
      %s157 = sphi 0, %s157
      %s159 = sphi 0, %s157
      %s160 = sphi 0, %s159
      %s174 = sphi 0, %s160
      %s178 = sphi 0, %s178
      %s180 = sphi 0, %s178
      %s181 = sphi 0, %s180
      %s195 = sphi 0, %s181
      %s199 = sphi 0, %s199
      %s201 = sphi 0, %s199
      %s202 = sphi 0, %s201
      %s216 = sphi 0, %s202
      %s222 = sphi 0, %s224
      %s225 = sphi 0, %s222
      %s226 = sphi 0, %s225
      %s242 = sphi 0, %s226
    $region4: #{tpu_custom_call.1} parent=1 // loop_header_branch
      %21 = sbr.rel (%p19) target = $region8
    $region5: #{tpu_custom_call.1} parent=1 // loop_body
      %s23 = ssub.s32 %s18, 1
      %s24 = ssub.s32 %s18, 2
      %s25 = sadd.s32 %s18, 1
      %s26 = ssub.s32 %s18, %s25
      %p27 = scmp.eq.s32.totalorder %s26, 0
      %s29 = sadd.s32 %s28, 1
      %s30 = scalar_select %p27, %s28, %s29
      %p33 = pneg %p27
      %p34 = scmp.eq.s32.totalorder %s18, 1
      %p35 = por %p33, %p34
      %p36 = scmp.ne.s32.totalorder %s28, %s31
      %p37 = scmp.eq.s32.totalorder %s18, 0
      %p38 = por %p36, %p37
      %p39 = scmp.ne.s32.totalorder %s28, %s31
      %p40 = scmp.eq.s32.totalorder %s23, 1
      %p41 = por %p39, %p40
      %p42 = scmp.ne.s32.totalorder %s31, %s32
      %p43 = scmp.eq.s32.totalorder %s23, 0
      %p44 = por %p42, %p43
      %p45 = scmp.ne.s32.totalorder %s31, %s32
      %p46 = scmp.eq.s32.totalorder %s24, 1
      %p47 = por %p45, %p46
      %p49 = scmp.ne.s32.totalorder %s32, %s48
      %p50 = scmp.eq.s32.totalorder %s24, 0
      %p51 = por %p49, %p50
      %s53 = sadd.s32 %s52, 1
      %p56 = scmp.eq.s32.totalorder %s18, 1
      %p57 = scmp.ne.s32.totalorder %s52, %s54
      %p58 = scmp.eq.s32.totalorder %s18, 0
      %p59 = por %p57, %p58
      %p60 = scmp.ne.s32.totalorder %s52, %s54
      %p61 = scmp.eq.s32.totalorder %s23, 1
      %p62 = por %p60, %p61
      %p63 = scmp.ne.s32.totalorder %s54, %s55
      %p64 = scmp.eq.s32.totalorder %s23, 0
      %p65 = por %p63, %p64
      %p66 = scmp.ne.s32.totalorder %s54, %s55
      %p67 = scmp.eq.s32.totalorder %s24, 1
      %p68 = por %p66, %p67
      %p70 = scmp.ne.s32.totalorder %s55, %s69
      %p71 = scmp.eq.s32.totalorder %s24, 0
      %p72 = por %p70, %p71
      %s74 = sadd.s32 %s73, 1
      %p77 = scmp.eq.s32.totalorder %s18, 1
      %p78 = scmp.ne.s32.totalorder %s73, %s75
      %p79 = scmp.eq.s32.totalorder %s18, 0
      %p80 = por %p78, %p79
      %p81 = scmp.ne.s32.totalorder %s73, %s75
      %p82 = scmp.eq.s32.totalorder %s23, 1
      %p83 = por %p81, %p82
      %p84 = scmp.ne.s32.totalorder %s75, %s76
      %p85 = scmp.eq.s32.totalorder %s23, 0
      %p86 = por %p84, %p85
      %p87 = scmp.ne.s32.totalorder %s75, %s76
      %p88 = scmp.eq.s32.totalorder %s24, 1
      %p89 = por %p87, %p88
      %p91 = scmp.ne.s32.totalorder %s76, %s90
      %p92 = scmp.eq.s32.totalorder %s24, 0
      %p93 = por %p91, %p92
      %s95 = sadd.s32 %s94, 1
      %p98 = scmp.eq.s32.totalorder %s18, 1
      %p99 = scmp.ne.s32.totalorder %s94, %s96
      %p100 = scmp.eq.s32.totalorder %s18, 0
      %p101 = por %p99, %p100
      %p102 = scmp.ne.s32.totalorder %s94, %s96
      %p103 = scmp.eq.s32.totalorder %s23, 1
      %p104 = por %p102, %p103
      %p105 = scmp.ne.s32.totalorder %s96, %s97
      %p106 = scmp.eq.s32.totalorder %s23, 0
      %p107 = por %p105, %p106
      %p108 = scmp.ne.s32.totalorder %s96, %s97
      %p109 = scmp.eq.s32.totalorder %s24, 1
      %p110 = por %p108, %p109
      %p112 = scmp.ne.s32.totalorder %s97, %s111
      %p113 = scmp.eq.s32.totalorder %s24, 0
      %p114 = por %p112, %p113
      %s116 = sadd.s32 %s115, 1
      %p119 = scmp.eq.s32.totalorder %s18, 1
      %p120 = scmp.ne.s32.totalorder %s115, %s117
      %p121 = scmp.eq.s32.totalorder %s18, 0
      %p122 = por %p120, %p121
      %p123 = scmp.ne.s32.totalorder %s115, %s117
      %p124 = scmp.eq.s32.totalorder %s23, 1
      %p125 = por %p123, %p124
      %p126 = scmp.ne.s32.totalorder %s117, %s118
      %p127 = scmp.eq.s32.totalorder %s23, 0
      %p128 = por %p126, %p127
      %p129 = scmp.ne.s32.totalorder %s117, %s118
      %p130 = scmp.eq.s32.totalorder %s24, 1
      %p131 = por %p129, %p130
      %p133 = scmp.ne.s32.totalorder %s118, %s132
      %p134 = scmp.eq.s32.totalorder %s24, 0
      %p135 = por %p133, %p134
      %s137 = sadd.s32 %s136, 1
      %p140 = scmp.eq.s32.totalorder %s18, 1
      %p141 = scmp.ne.s32.totalorder %s136, %s138
      %p142 = scmp.eq.s32.totalorder %s18, 0
      %p143 = por %p141, %p142
      %p144 = scmp.ne.s32.totalorder %s136, %s138
      %p145 = scmp.eq.s32.totalorder %s23, 1
      %p146 = por %p144, %p145
      %p147 = scmp.ne.s32.totalorder %s138, %s139
      %p148 = scmp.eq.s32.totalorder %s23, 0
      %p149 = por %p147, %p148
      %p150 = scmp.ne.s32.totalorder %s138, %s139
      %p151 = scmp.eq.s32.totalorder %s24, 1
      %p152 = por %p150, %p151
      %p154 = scmp.ne.s32.totalorder %s139, %s153
      %p155 = scmp.eq.s32.totalorder %s24, 0
      %p156 = por %p154, %p155
      %s158 = sadd.s32 %s157, 1
      %p161 = scmp.eq.s32.totalorder %s18, 1
      %p162 = scmp.ne.s32.totalorder %s157, %s159
      %p163 = scmp.eq.s32.totalorder %s18, 0
      %p164 = por %p162, %p163
      %p165 = scmp.ne.s32.totalorder %s157, %s159
      %p166 = scmp.eq.s32.totalorder %s23, 1
      %p167 = por %p165, %p166
      %p168 = scmp.ne.s32.totalorder %s159, %s160
      %p169 = scmp.eq.s32.totalorder %s23, 0
      %p170 = por %p168, %p169
      %p171 = scmp.ne.s32.totalorder %s159, %s160
      %p172 = scmp.eq.s32.totalorder %s24, 1
      %p173 = por %p171, %p172
      %p175 = scmp.ne.s32.totalorder %s160, %s174
      %p176 = scmp.eq.s32.totalorder %s24, 0
      %p177 = por %p175, %p176
      %s179 = sadd.s32 %s178, 1
      %p182 = scmp.eq.s32.totalorder %s18, 1
      %p183 = scmp.ne.s32.totalorder %s178, %s180
      %p184 = scmp.eq.s32.totalorder %s18, 0
      %p185 = por %p183, %p184
      %p186 = scmp.ne.s32.totalorder %s178, %s180
      %p187 = scmp.eq.s32.totalorder %s23, 1
      %p188 = por %p186, %p187
      %p189 = scmp.ne.s32.totalorder %s180, %s181
      %p190 = scmp.eq.s32.totalorder %s23, 0
      %p191 = por %p189, %p190
      %p192 = scmp.ne.s32.totalorder %s180, %s181
      %p193 = scmp.eq.s32.totalorder %s24, 1
      %p194 = por %p192, %p193
      %p196 = scmp.ne.s32.totalorder %s181, %s195
      %p197 = scmp.eq.s32.totalorder %s24, 0
      %p198 = por %p196, %p197
      %s200 = sadd.s32 %s199, 1
      %p203 = scmp.eq.s32.totalorder %s18, 1
      %p204 = scmp.ne.s32.totalorder %s199, %s201
      %p205 = scmp.eq.s32.totalorder %s18, 0
      %p206 = por %p204, %p205
      %p207 = scmp.ne.s32.totalorder %s199, %s201
      %p208 = scmp.eq.s32.totalorder %s23, 1
      %p209 = por %p207, %p208
      %p210 = scmp.ne.s32.totalorder %s201, %s202
      %p211 = scmp.eq.s32.totalorder %s23, 0
      %p212 = por %p210, %p211
      %p213 = scmp.ne.s32.totalorder %s201, %s202
      %p214 = scmp.eq.s32.totalorder %s24, 1
      %p215 = por %p213, %p214
      %p217 = scmp.ne.s32.totalorder %s202, %s216
      %p218 = scmp.eq.s32.totalorder %s24, 0
      %p219 = por %p217, %p218
      %s220 = ssub.s32 %s18, %s25
      %p221 = scmp.eq.s32.totalorder %s220, 0
      %s223 = sadd.s32 %s222, 1
      %s224 = scalar_select %p221, %s222, %s223
      %p227 = pneg %p221
      %p228 = scmp.eq.s32.totalorder %s18, 1
      %p229 = por %p227, %p228
      %p230 = scmp.ne.s32.totalorder %s222, %s225
      %p231 = scmp.eq.s32.totalorder %s18, 0
      %p232 = por %p230, %p231
      %p233 = scmp.ne.s32.totalorder %s222, %s225
      %p234 = scmp.eq.s32.totalorder %s23, 1
      %p235 = por %p233, %p234
      %p236 = scmp.ne.s32.totalorder %s225, %s226
      %p237 = scmp.eq.s32.totalorder %s23, 0
      %p238 = por %p236, %p237
      %p239 = scmp.ne.s32.totalorder %s225, %s226
      %p240 = scmp.eq.s32.totalorder %s24, 1
      %p241 = por %p239, %p240
      %p243 = scmp.ne.s32.totalorder %s226, %s242
      %p244 = scmp.eq.s32.totalorder %s24, 0
      %p245 = por %p243, %p244
      %p246 = scmp.le.s32.totalorder 1, %s18
      %p247 = scmp.lt.s32.totalorder %s18, 3
      %p248 = pnand %p246, %p247
      %p249 = pneg %p248
      // Predicated region
      $region9: #{tpu_custom_call.1} parent=5 // pred_check
        _
      $region10: #{tpu_custom_call.1} parent=5 // pred_check_branch
        %251 = sbr.rel (%p248) target = $region12
      $region11: #{tpu_custom_call.1} parent=5 // pred_region
        %s252 = ssub.s32 %s18, 1
        // Predicated region
        $region13: #{tpu_custom_call.1} parent=11 // pred_check
          %p253 = pneg %p65
        $region14: #{tpu_custom_call.1} parent=11 // pred_check_branch
          %255 = sbr.rel (%p253) target = $region16
        $region15: #{tpu_custom_call.1} parent=11 // pred_region
          _
        $region16: #{tpu_custom_call.1} parent=11 // pred_fallthru
          _
        // Predicated region
        $region17: #{tpu_custom_call.1} parent=11 // pred_check
          %p256 = pneg %p86
        $region18: #{tpu_custom_call.1} parent=11 // pred_check_branch
          %258 = sbr.rel (%p256) target = $region20
        $region19: #{tpu_custom_call.1} parent=11 // pred_region
          _
        $region20: #{tpu_custom_call.1} parent=11 // pred_fallthru
          _
        // Predicated region
        $region21: #{tpu_custom_call.1} parent=11 // pred_check
          %p259 = pneg %p107
        $region22: #{tpu_custom_call.1} parent=11 // pred_check_branch
          %261 = sbr.rel (%p259) target = $region24
        $region23: #{tpu_custom_call.1} parent=11 // pred_region
          _
        $region24: #{tpu_custom_call.1} parent=11 // pred_fallthru
          _
        // Predicated region
        $region25: #{tpu_custom_call.1} parent=11 // pred_check
          %p262 = pneg %p128
        $region26: #{tpu_custom_call.1} parent=11 // pred_check_branch
          %264 = sbr.rel (%p262) target = $region28
        $region27: #{tpu_custom_call.1} parent=11 // pred_region
          _
        $region28: #{tpu_custom_call.1} parent=11 // pred_fallthru
          _
        // Predicated region
        $region29: #{tpu_custom_call.1} parent=11 // pred_check
          %p265 = pneg %p149
        $region30: #{tpu_custom_call.1} parent=11 // pred_check_branch
          %267 = sbr.rel (%p265) target = $region32
        $region31: #{tpu_custom_call.1} parent=11 // pred_region
          _
        $region32: #{tpu_custom_call.1} parent=11 // pred_fallthru
          _
        // Predicated region
        $region33: #{tpu_custom_call.1} parent=11 // pred_check
          %p268 = pneg %p170
        $region34: #{tpu_custom_call.1} parent=11 // pred_check_branch
          %270 = sbr.rel (%p268) target = $region36
        $region35: #{tpu_custom_call.1} parent=11 // pred_region
          _
        $region36: #{tpu_custom_call.1} parent=11 // pred_fallthru
          _
        // Predicated region
        $region37: #{tpu_custom_call.1} parent=11 // pred_check
          %p271 = pneg %p191
        $region38: #{tpu_custom_call.1} parent=11 // pred_check_branch
          %273 = sbr.rel (%p271) target = $region40
        $region39: #{tpu_custom_call.1} parent=11 // pred_region
          _
        $region40: #{tpu_custom_call.1} parent=11 // pred_fallthru
          _
        // Predicated region
        $region41: #{tpu_custom_call.1} parent=11 // pred_check
          %p274 = pneg %p212
        $region42: #{tpu_custom_call.1} parent=11 // pred_check_branch
          %276 = sbr.rel (%p274) target = $region44
        $region43: #{tpu_custom_call.1} parent=11 // pred_region
          _
        $region44: #{tpu_custom_call.1} parent=11 // pred_fallthru
          _
      $region12: #{tpu_custom_call.1} parent=5 // pred_fallthru
        _
      %p277 = scmp.lt.s32.totalorder %s18, 2
      // Predicated region
      $region45: #{tpu_custom_call.1} parent=5 // pred_check
        %p278 = pneg %p277
      $region46: #{tpu_custom_call.1} parent=5 // pred_check_branch
        %280 = sbr.rel (%p278) target = $region48
      $region47: #{tpu_custom_call.1} parent=5 // pred_region
        // Predicated region
        $region49: #{tpu_custom_call.1} parent=47 // pred_check
          %p281 = pneg %p38
        $region50: #{tpu_custom_call.1} parent=47 // pred_check_branch
          %283 = sbr.rel (%p281) target = $region52
        $region51: #{tpu_custom_call.1} parent=47 // pred_region
          %p284 = scmp.lt.s32.totalorder %s18, 1
          %s285 = scalar_select %p284, %s18, 1
          %s286 = smul.addr %s285, 3
          %s287 = smul.addr %s286, 4
          %s288 = scalar_lea.vmem %s0, %s287
        $region52: #{tpu_custom_call.1} parent=47 // pred_fallthru
          _
      $region48: #{tpu_custom_call.1} parent=5 // pred_fallthru
        _
      %p289 = scmp.le.s32.totalorder 1, %s18
      %p290 = scmp.lt.s32.totalorder %s18, 3
      %p291 = pnand %p289, %p290
      %p292 = pneg %p291
      // Predicated region
      $region53: #{tpu_custom_call.1} parent=5 // pred_check
        _
      $region54: #{tpu_custom_call.1} parent=5 // pred_check_branch
        %294 = sbr.rel (%p291) target = $region56
      $region55: #{tpu_custom_call.1} parent=5 // pred_region
        %s295 = ssub.s32 %s18, 1
        %p296 = scmp.lt.s32.totalorder %s23, 1
        %s297 = scalar_select %p296, %s23, 1
        %s298 = smul.addr %s297, 3
        %s299 = smul.addr %s298, 4
        %s300 = scalar_lea.vmem %s0, %s299
        %p301 = pneg %p44
        %p302 = pneg %p41
        %p303 = pneg %p65
        %p304 = pneg %p62
        %p305 = pneg %p86
        %p306 = pneg %p83
        %p307 = pneg %p107
        %p308 = pneg %p104
        %p309 = pneg %p128
        %p310 = pneg %p125
        %p311 = pneg %p149
        %p312 = pneg %p146
        %p313 = pneg %p170
        %p314 = pneg %p167
        %p315 = pneg %p191
        %p316 = pneg %p188
        %p317 = pneg %p212
        %p318 = pneg %p209
        %p319 = pneg %p238
        %p320 = pneg %p235
        %s321 = sand.u32 %s225, 1
        %s322 = scalar_lea.sflag [#allocation3], %s321
        %s323 = sand.u32 %s225, 1
        %s324 = smul.addr %s323, 8
        %s325 = scalar_lea.vmem [#allocation2], %s324
        %p326 = scmp.lt.s32.totalorder %s23, 1
        %s327 = scalar_select %p326, %s23, 1
        %s328 = smul.addr %s327, 3
        %s329 = smul.addr %s328, 4
        %s330 = scalar_lea.vmem %s0, %s329
        %v332 = vld [vmem:[%s330] sm:$0xf]
        %v333 = vld [vmem:[%s330 + $0x4] sm:$0xf]
        %v334 = vld [vmem:[%s1] sm:$0xf]
        %v335 = vld [vmem:[%s1 + $0x4] sm:$0xf]
        %v336 = vld [vmem:[%s1 + $0x8] sm:$0xf]
        %v337 = vld [vmem:[%s1 + $0xc] sm:$0xf]
        %v338 = vld [vmem:[%s1 + $0x10] sm:$0xf]
        %v339 = vld [vmem:[%s1 + $0x14] sm:$0xf]
        %v340 = vld [vmem:[%s1 + $0x18] sm:$0xf]
        %v341 = vld [vmem:[%s1 + $0x1c] sm:$0xf]
        %v342 = vld [vmem:[%s330 + $0x8] sm:$0x1]
        %s343 = scalar_lea.vmem %s1, 32
        %v344 = vld [vmem:[%s343] sm:$0xf]
        %v345 = vld [vmem:[%s343 + $0x4] sm:$0xf]
        %v346 = vld [vmem:[%s343 + $0x8] sm:$0xf]
        %v347 = vld [vmem:[%s343 + $0xc] sm:$0xf]
        %v348 = vld [vmem:[%s343 + $0x10] sm:$0xf]
        %v349 = vld [vmem:[%s343 + $0x14] sm:$0xf]
        %v350 = vld [vmem:[%s343 + $0x18] sm:$0xf]
        %v351 = vld [vmem:[%s343 + $0x1c] sm:$0xf]
        %v355 = vunpack.c.l.b16 %v332
        %v356 = vunpack.c.l.b16 %v333
        %v357 = vunpack.c.l.b16 %v342
        %v358 = vpack.c.b16 %v356, %v355
        %v359 = vpack.c.b16 %v357, %v357
        %vm360 = vsmask.f32 7424
        %v362 = vshrl.u32 %v358, 16
        %v364 = vshll.u32 %v358, 16
        %v366 = vrot.slane %v364, 1
        %v367 = vor.u32 %v362, %v366
        %v369 = vshll.u32 %v359, 16
        %v371 = vrot.slane %v369, 1
        %v372 = vsel %vm360, %v367, %v371
        %v381 = vunpack.c.l.b16 %v344
        %v382 = vunpack.c.l.b16 %v345
        %v383 = vunpack.c.l.b16 %v346
        %v384 = vunpack.c.l.b16 %v347
        %v385 = vunpack.c.l.b16 %v348
        %v386 = vunpack.c.l.b16 %v349
        %v387 = vunpack.c.l.b16 %v350
        %v388 = vunpack.c.l.b16 %v351
        %v389 = vpack.c.b16 %v382, %v381
        %v390 = vpack.c.b16 %v384, %v383
        %v391 = vpack.c.b16 %v386, %v385
        %v392 = vpack.c.b16 %v388, %v387
        %vm397 = vcmask 523264
        %v399 = vsel %vm397, %v372, 0
        %401 = vmatpush.bf16.msra.mxu0 0
        %402 = vmatpush.bf16.msra.mxu0 0
        %403 = vmatpush.bf16.msra.mxu0 0
        %404 = vmatpush.bf16.msra.mxu0 0
        %405 = vmatpush.bf16.msra.mxu0 %v392
        %406 = vmatpush.bf16.msra.mxu0 %v391
        %407 = vmatpush.bf16.msra.mxu0 %v390
        %408 = vmatpush.bf16.msra.mxu0 %v389
        %409 = vmatmul.bf16.gmra.mxu0 %v399
        %v410 = vpop.f32.mrf.mxu0
        %v411 = vadd.f32 0.0, %v410
        %v412 = vpop.f32.mrf.mxu0
        %v413 = vadd.f32 0.0, %v412
        %414 = vdwg.mxu0
        %v423 = vunpack.c.l.b16 %v334
        %v424 = vunpack.c.l.b16 %v335
        %v425 = vunpack.c.l.b16 %v336
        %v426 = vunpack.c.l.b16 %v337
        %v427 = vunpack.c.l.b16 %v338
        %v428 = vunpack.c.l.b16 %v339
        %v429 = vunpack.c.l.b16 %v340
        %v430 = vunpack.c.l.b16 %v341
        %v431 = vpack.c.b16 %v424, %v423
        %v432 = vpack.c.b16 %v426, %v425
        %v433 = vpack.c.b16 %v428, %v427
        %v434 = vpack.c.b16 %v430, %v429
        %v439 = vsel %vm397, %v358, 0
        %441 = vmatpush.bf16.msra.mxu0 0
        %442 = vmatpush.bf16.msra.mxu0 0
        %443 = vmatpush.bf16.msra.mxu0 0
        %444 = vmatpush.bf16.msra.mxu0 0
        %445 = vmatpush.bf16.msra.mxu0 %v434
        %446 = vmatpush.bf16.msra.mxu0 %v433
        %447 = vmatpush.bf16.msra.mxu0 %v432
        %448 = vmatpush.bf16.msra.mxu0 %v431
        %449 = vmatmul.bf16.gmra.mxu0 %v439
        %v450 = vpop.f32.mrf.mxu0
        %v451 = vadd.f32 %v411, %v450
        %v452 = vpop.f32.mrf.mxu0
        %v453 = vadd.f32 %v413, %v452
        %454 = vdwg.mxu0
        %v455 = vld [vmem:[%s330] sm:$0xe]
        %s456 = scalar_lea.vmem %s1, 64
        %v457 = vld [vmem:[%s456] sm:$0xf]
        %v458 = vld [vmem:[%s456 + $0x4] sm:$0xf]
        %v459 = vld [vmem:[%s456 + $0x8] sm:$0xf]
        %v460 = vld [vmem:[%s456 + $0xc] sm:$0xf]
        %v461 = vld [vmem:[%s456 + $0x10] sm:$0xf]
        %v462 = vld [vmem:[%s456 + $0x14] sm:$0xf]
        %v463 = vld [vmem:[%s456 + $0x18] sm:$0xf]
        %v464 = vld [vmem:[%s456 + $0x1c] sm:$0xf]
        %v466 = vunpack.c.l.b16 %v455
        %v467 = vpack.c.b16 %v356, %v466
        %vm468 = vcmask 1046528
        %v469 = vrot.slane %v467, 1
        %v470 = vrot.slane %v359, 1
        %v471 = vsel %vm468, %v469, %v470
        %v480 = vunpack.c.l.b16 %v457
        %v481 = vunpack.c.l.b16 %v458
        %v482 = vunpack.c.l.b16 %v459
        %v483 = vunpack.c.l.b16 %v460
        %v484 = vunpack.c.l.b16 %v461
        %v485 = vunpack.c.l.b16 %v462
        %v486 = vunpack.c.l.b16 %v463
        %v487 = vunpack.c.l.b16 %v464
        %v488 = vpack.c.b16 %v481, %v480
        %v489 = vpack.c.b16 %v483, %v482
        %v490 = vpack.c.b16 %v485, %v484
        %v491 = vpack.c.b16 %v487, %v486
        %v497 = vsel %vm397, %v471, 0
        %499 = vmatpush.bf16.msra.mxu0 0
        %500 = vmatpush.bf16.msra.mxu0 0
        %501 = vmatpush.bf16.msra.mxu0 0
        %502 = vmatpush.bf16.msra.mxu0 0
        %503 = vmatpush.bf16.msra.mxu0 %v491
        %504 = vmatpush.bf16.msra.mxu0 %v490
        %505 = vmatpush.bf16.msra.mxu0 %v489
        %506 = vmatpush.bf16.msra.mxu0 %v488
        %507 = vmatmul.bf16.gmra.mxu0 %v497
        %v508 = vpop.f32.mrf.mxu0
        %v509 = vadd.f32 0.0, %v508
        %v510 = vpop.f32.mrf.mxu0
        %v511 = vadd.f32 0.0, %v510
        %512 = vdwg.mxu0
        %v513 = vadd.f32 %v451, %v509
        %v514 = vadd.f32 %v453, %v511
        %v515 = vld [vmem:[%s6] sm:$0x1]
        %v517 = vperm.slane %v515, 0
        %v519 = vadd.f32 %v513, %v517
        %v520 = vadd.f32 %v514, %v517
        %v521 = vmax.f32 %v519, 0.0
        %v522 = vmax.f32 %v520, 0.0
        %v523 = vpack.c.bf16 %v521, %v521
        %v524 = vpack.c.bf16 %v522, %v522
        %v527 = vunpack.c.l.b16 %v523
        %v528 = vunpack.c.l.b16 %v524
        %v529 = vpack.c.b16 %v528, %v527
        %v531 = vshrl.u32 %v529, 16
        %v533 = vrot.slane %v531, 7
        %v534 = vshll.u32 %v529, 16
        %v536 = vor.u32 %v533, %v534
        %vm539 = vcmask 1040384
        %vm540 = vsmask.f32 256
        %vm541 = vmand %vm539, %vm540
        %v542 = vsel %vm541, 0, %v536
        %v543 = vsel %vm541, %v533, 0
        %v544 = vld [vmem:[%s2] sm:$0xf]
        %v545 = vld [vmem:[%s2 + $0x4] sm:$0xf]
        %v546 = vld [vmem:[%s2 + $0x8] sm:$0xf]
        %v547 = vld [vmem:[%s2 + $0xc] sm:$0xf]
        %v548 = vld [vmem:[%s2 + $0x10] sm:$0xf]
        %v549 = vld [vmem:[%s2 + $0x14] sm:$0xf]
        %v550 = vld [vmem:[%s2 + $0x18] sm:$0xf]
        %v551 = vld [vmem:[%s2 + $0x1c] sm:$0xf]
        %v552 = vld [vmem:[%s2 + $0x20] sm:$0xf]
        %v553 = vld [vmem:[%s2 + $0x24] sm:$0xf]
        %v554 = vld [vmem:[%s2 + $0x28] sm:$0xf]
        %v555 = vld [vmem:[%s2 + $0x2c] sm:$0xf]
        %v556 = vld [vmem:[%s2 + $0x30] sm:$0xf]
        %v557 = vld [vmem:[%s2 + $0x34] sm:$0xf]
        %v558 = vld [vmem:[%s2 + $0x38] sm:$0xf]
        %v559 = vld [vmem:[%s2 + $0x3c] sm:$0xf]
        %s560 = scalar_lea.vmem %s2, 64
        %v561 = vld [vmem:[%s560] sm:$0xf]
        %v562 = vld [vmem:[%s560 + $0x4] sm:$0xf]
        %v563 = vld [vmem:[%s560 + $0x8] sm:$0xf]
        %v564 = vld [vmem:[%s560 + $0xc] sm:$0xf]
        %v565 = vld [vmem:[%s560 + $0x10] sm:$0xf]
        %v566 = vld [vmem:[%s560 + $0x14] sm:$0xf]
        %v567 = vld [vmem:[%s560 + $0x18] sm:$0xf]
        %v568 = vld [vmem:[%s560 + $0x1c] sm:$0xf]
        %v569 = vld [vmem:[%s560 + $0x20] sm:$0xf]
        %v570 = vld [vmem:[%s560 + $0x24] sm:$0xf]
        %v571 = vld [vmem:[%s560 + $0x28] sm:$0xf]
        %v572 = vld [vmem:[%s560 + $0x2c] sm:$0xf]
        %v573 = vld [vmem:[%s560 + $0x30] sm:$0xf]
        %v574 = vld [vmem:[%s560 + $0x34] sm:$0xf]
        %v575 = vld [vmem:[%s560 + $0x38] sm:$0xf]
        %v576 = vld [vmem:[%s560 + $0x3c] sm:$0xf]
        %v578 = vshrl.u32 %v542, 16
        %v580 = vshll.u32 %v542, 16
        %v582 = vrot.slane %v580, 1
        %v583 = vor.u32 %v578, %v582
        %v585 = vshll.u32 %v543, 16
        %v587 = vrot.slane %v585, 1
        %v588 = vsel %vm360, %v583, %v587
        %v606 = vunpack.c.l.b16 %v561
        %v607 = vunpack.c.l.b16 %v562
        %v608 = vunpack.c.l.b16 %v563
        %v609 = vunpack.c.l.b16 %v564
        %v610 = vunpack.c.l.b16 %v565
        %v611 = vunpack.c.l.b16 %v566
        %v612 = vunpack.c.l.b16 %v567
        %v613 = vunpack.c.l.b16 %v568
        %v614 = vunpack.c.l.b16 %v569
        %v615 = vunpack.c.l.b16 %v570
        %v616 = vunpack.c.l.b16 %v571
        %v617 = vunpack.c.l.b16 %v572
        %v618 = vunpack.c.l.b16 %v573
        %v619 = vunpack.c.l.b16 %v574
        %v620 = vunpack.c.l.b16 %v575
        %v621 = vunpack.c.l.b16 %v576
        %v622 = vpack.c.b16 %v607, %v606
        %v623 = vpack.c.b16 %v609, %v608
        %v624 = vpack.c.b16 %v611, %v610
        %v625 = vpack.c.b16 %v613, %v612
        %v626 = vpack.c.b16 %v615, %v614
        %v627 = vpack.c.b16 %v617, %v616
        %v628 = vpack.c.b16 %v619, %v618
        %v629 = vpack.c.b16 %v621, %v620
        %638 = vmatpush.bf16.msra.mxu0 %v629
        %639 = vmatpush.bf16.msra.mxu0 %v628
        %640 = vmatpush.bf16.msra.mxu0 %v627
        %641 = vmatpush.bf16.msra.mxu0 %v626
        %642 = vmatpush.bf16.msra.mxu0 %v625
        %643 = vmatpush.bf16.msra.mxu0 %v624
        %644 = vmatpush.bf16.msra.mxu0 %v623
        %645 = vmatpush.bf16.msra.mxu0 %v622
        %646 = vmatmul.bf16.gmra.mxu0 %v588
        %v647 = vpop.f32.mrf.mxu0
        %v648 = vadd.f32 0.0, %v647
        %v649 = vpop.f32.mrf.mxu0
        %v650 = vadd.f32 0.0, %v649
        %651 = vdwg.mxu0
        %v668 = vunpack.c.l.b16 %v544
        %v669 = vunpack.c.l.b16 %v545
        %v670 = vunpack.c.l.b16 %v546
        %v671 = vunpack.c.l.b16 %v547
        %v672 = vunpack.c.l.b16 %v548
        %v673 = vunpack.c.l.b16 %v549
        %v674 = vunpack.c.l.b16 %v550
        %v675 = vunpack.c.l.b16 %v551
        %v676 = vunpack.c.l.b16 %v552
        %v677 = vunpack.c.l.b16 %v553
        %v678 = vunpack.c.l.b16 %v554
        %v679 = vunpack.c.l.b16 %v555
        %v680 = vunpack.c.l.b16 %v556
        %v681 = vunpack.c.l.b16 %v557
        %v682 = vunpack.c.l.b16 %v558
        %v683 = vunpack.c.l.b16 %v559
        %v684 = vpack.c.b16 %v669, %v668
        %v685 = vpack.c.b16 %v671, %v670
        %v686 = vpack.c.b16 %v673, %v672
        %v687 = vpack.c.b16 %v675, %v674
        %v688 = vpack.c.b16 %v677, %v676
        %v689 = vpack.c.b16 %v679, %v678
        %v690 = vpack.c.b16 %v681, %v680
        %v691 = vpack.c.b16 %v683, %v682
        %700 = vmatpush.bf16.msra.mxu0 %v691
        %701 = vmatpush.bf16.msra.mxu0 %v690
        %702 = vmatpush.bf16.msra.mxu0 %v689
        %703 = vmatpush.bf16.msra.mxu0 %v688
        %704 = vmatpush.bf16.msra.mxu0 %v687
        %705 = vmatpush.bf16.msra.mxu0 %v686
        %706 = vmatpush.bf16.msra.mxu0 %v685
        %707 = vmatpush.bf16.msra.mxu0 %v684
        %708 = vmatmul.bf16.gmra.mxu0 %v542
        %v709 = vpop.f32.mrf.mxu0
        %v710 = vadd.f32 %v648, %v709
        %v711 = vpop.f32.mrf.mxu0
        %v712 = vadd.f32 %v650, %v711
        %713 = vdwg.mxu0
        %s714 = scalar_lea.vmem %s2, 128
        %v715 = vld [vmem:[%s714] sm:$0xf]
        %v716 = vld [vmem:[%s714 + $0x4] sm:$0xf]
        %v717 = vld [vmem:[%s714 + $0x8] sm:$0xf]
        %v718 = vld [vmem:[%s714 + $0xc] sm:$0xf]
        %v719 = vld [vmem:[%s714 + $0x10] sm:$0xf]
        %v720 = vld [vmem:[%s714 + $0x14] sm:$0xf]
        %v721 = vld [vmem:[%s714 + $0x18] sm:$0xf]
        %v722 = vld [vmem:[%s714 + $0x1c] sm:$0xf]
        %v723 = vld [vmem:[%s714 + $0x20] sm:$0xf]
        %v724 = vld [vmem:[%s714 + $0x24] sm:$0xf]
        %v725 = vld [vmem:[%s714 + $0x28] sm:$0xf]
        %v726 = vld [vmem:[%s714 + $0x2c] sm:$0xf]
        %v727 = vld [vmem:[%s714 + $0x30] sm:$0xf]
        %v728 = vld [vmem:[%s714 + $0x34] sm:$0xf]
        %v729 = vld [vmem:[%s714 + $0x38] sm:$0xf]
        %v730 = vld [vmem:[%s714 + $0x3c] sm:$0xf]
        %v733 = vrot.slane %v542, 1
        %v734 = vrot.slane %v543, 1
        %v735 = vsel %vm468, %v733, %v734
        %v753 = vunpack.c.l.b16 %v715
        %v754 = vunpack.c.l.b16 %v716
        %v755 = vunpack.c.l.b16 %v717
        %v756 = vunpack.c.l.b16 %v718
        %v757 = vunpack.c.l.b16 %v719
        %v758 = vunpack.c.l.b16 %v720
        %v759 = vunpack.c.l.b16 %v721
        %v760 = vunpack.c.l.b16 %v722
        %v761 = vunpack.c.l.b16 %v723
        %v762 = vunpack.c.l.b16 %v724
        %v763 = vunpack.c.l.b16 %v725
        %v764 = vunpack.c.l.b16 %v726
        %v765 = vunpack.c.l.b16 %v727
        %v766 = vunpack.c.l.b16 %v728
        %v767 = vunpack.c.l.b16 %v729
        %v768 = vunpack.c.l.b16 %v730
        %v769 = vpack.c.b16 %v754, %v753
        %v770 = vpack.c.b16 %v756, %v755
        %v771 = vpack.c.b16 %v758, %v757
        %v772 = vpack.c.b16 %v760, %v759
        %v773 = vpack.c.b16 %v762, %v761
        %v774 = vpack.c.b16 %v764, %v763
        %v775 = vpack.c.b16 %v766, %v765
        %v776 = vpack.c.b16 %v768, %v767
        %785 = vmatpush.bf16.msra.mxu0 %v776
        %786 = vmatpush.bf16.msra.mxu0 %v775
        %787 = vmatpush.bf16.msra.mxu0 %v774
        %788 = vmatpush.bf16.msra.mxu0 %v773
        %789 = vmatpush.bf16.msra.mxu0 %v772
        %790 = vmatpush.bf16.msra.mxu0 %v771
        %791 = vmatpush.bf16.msra.mxu0 %v770
        %792 = vmatpush.bf16.msra.mxu0 %v769
        %793 = vmatmul.bf16.gmra.mxu0 %v735
        %v794 = vpop.f32.mrf.mxu0
        %v795 = vadd.f32 0.0, %v794
        %v796 = vpop.f32.mrf.mxu0
        %v797 = vadd.f32 0.0, %v796
        %798 = vdwg.mxu0
        %v799 = vadd.f32 %v710, %v795
        %v800 = vadd.f32 %v712, %v797
        %v801 = vld [vmem:[%s4] sm:$0xff]
        %v802 = vld [vmem:[%s7] sm:$0x1]
        %v804 = vperm.slane %v802, 0
        %vm806 = vcmask 130048
        %v808 = vsel %vm806, %v801, 0
        %810 = vmatpush.msra.mxu0 0.0
        %811 = vmatpush.msra.mxu0 0.0
        %812 = vmatpush.msra.mxu0 0.0
        %813 = vmatpush.msra.mxu0 0.0
        %814 = vmatpush.msra.mxu0 0.0
        %815 = vmatpush.msra.mxu0 0.0
        %816 = vmatpush.msra.mxu0 0.0
        %817 = vmatpush.msra.mxu0 0.0
        %818 = vmatpush.msra.mxu0 0.0
        %819 = vmatpush.msra.mxu0 0.0
        %820 = vmatpush.msra.mxu0 0.0
        %821 = vmatpush.msra.mxu0 0.0
        %822 = vmatpush.msra.mxu0 0.0
        %823 = vmatpush.msra.mxu0 0.0
        %824 = vmatpush.msra.mxu0 %v800
        %825 = vmatpush.msra.mxu0 %v799
        %826 = vmatmul.f32.gmra.mxu0 %v808
        %v827 = vpop.f32.mrf.mxu0
        %v828 = vadd.f32 %v804, %v827
        %829 = vdwg.mxu0
        %v830 = vld [vmem:[%s5] sm:$0xff]
        %v831 = vunpack.c.l.bf16 %v332
        %v832 = vunpack.c.l.bf16 %v333
        %v833 = vunpack.c.l.bf16 %v342
        %vm834 = vcmask 146432
        %v836 = vsel %vm834, %v830, 0
        %vm838 = vcmask 1041408
        %v840 = vsel %vm838, %v833, 0
        %842 = vmatpush.msra.mxu0 0.0
        %843 = vmatpush.msra.mxu0 0.0
        %844 = vmatpush.msra.mxu0 0.0
        %845 = vmatpush.msra.mxu0 0.0
        %846 = vmatpush.msra.mxu0 0.0
        %847 = vmatpush.msra.mxu0 0.0
        %848 = vmatpush.msra.mxu0 0.0
        %849 = vmatpush.msra.mxu0 0.0
        %850 = vmatpush.msra.mxu0 0.0
        %851 = vmatpush.msra.mxu0 0.0
        %852 = vmatpush.msra.mxu0 0.0
        %853 = vmatpush.msra.mxu0 0.0
        %854 = vmatpush.msra.mxu0 0.0
        %855 = vmatpush.msra.mxu0 %v840
        %856 = vmatpush.msra.mxu0 %v832
        %857 = vmatpush.msra.mxu0 %v831
        %858 = vmatmul.f32.gmra.mxu0 %v836
        %v859 = vpop.f32.mrf.mxu0
        %v860 = vadd.f32 0.0, %v859
        %861 = vdwg.mxu0
        %v862 = vld [vmem:[%s3] sm:$0xff]
        %v863 = vld [vmem:[%s3 + $0x8] sm:$0xff]
        %v864 = vld [vmem:[%s3 + $0x10] sm:$0xff]
        %v865 = vld [vmem:[%s3 + $0x18] sm:$0xff]
        %v866 = vld [vmem:[%s3 + $0x20] sm:$0xff]
        %v867 = vld [vmem:[%s3 + $0x28] sm:$0xff]
        %v868 = vld [vmem:[%s3 + $0x30] sm:$0xff]
        %v869 = vld [vmem:[%s3 + $0x38] sm:$0xff]
        %v870 = vld [vmem:[%s8] sm:$0x1]
        %v872 = vperm.slane %v870, 0
        %v875 = vsel %vm397, %v860, 0
        %877 = vmatpush.msra.mxu0 0.0
        %878 = vmatpush.msra.mxu0 0.0
        %879 = vmatpush.msra.mxu0 0.0
        %880 = vmatpush.msra.mxu0 0.0
        %881 = vmatpush.msra.mxu0 0.0
        %882 = vmatpush.msra.mxu0 0.0
        %883 = vmatpush.msra.mxu0 0.0
        %884 = vmatpush.msra.mxu0 0.0
        %885 = vmatpush.msra.mxu0 %v869
        %886 = vmatpush.msra.mxu0 %v868
        %887 = vmatpush.msra.mxu0 %v867
        %888 = vmatpush.msra.mxu0 %v866
        %889 = vmatpush.msra.mxu0 %v865
        %890 = vmatpush.msra.mxu0 %v864
        %891 = vmatpush.msra.mxu0 %v863
        %892 = vmatpush.msra.mxu0 %v862
        %893 = vmatmul.f32.gmra.mxu0 %v875
        %v894 = vpop.f32.mrf.mxu0
        %v895 = vadd.f32 %v872, %v894
        %896 = vdwg.mxu0
        %v897 = vadd.f32 %v828, %v895
        %898 = vst.msk [vmem:[%s325] sm:$0xff] %vm397, %v897
        %s899 = sand.u32 %s225, 1
        %s900 = scalar_lea.sflag [#allocation3], %s899
        %s901 = sand.u32 %s225, 1
        %s902 = smul.addr %s901, 8
        %s903 = scalar_lea.vmem [#allocation2], %s902
        // Predicated region
        $region57: #{tpu_custom_call.1} parent=55 // pred_check
          %p904 = pneg %p235
        $region58: #{tpu_custom_call.1} parent=55 // pred_check_branch
          %906 = sbr.rel (%p904) target = $region60
        $region59: #{tpu_custom_call.1} parent=55 // pred_region
          %908 = vsyncadd %s900, 0
          %s909 = smul.addr %s23, 8
          %s910 = scalar_lea.hbm %s9, %s909
          %s912 = sshll.u32 %s903, 4
          %s913 = int_to_ptr.vmem [resolvable:$true] %s912
          %s914 = sshll.u32 %s910, 4
          %s915 = int_to_ptr.hbm [resolvable:$true] %s914
          %917 = dma.vmem_to_hbm [thread:$0]  %s913, 128, %s915, %s900
        $region60: #{tpu_custom_call.1} parent=55 // pred_fallthru
          _
      $region56: #{tpu_custom_call.1} parent=5 // pred_fallthru
        _
      %p918 = scmp.le.s32.totalorder 2, %s18
      // Predicated region
      $region61: #{tpu_custom_call.1} parent=5 // pred_check
        %p919 = pneg %p918
      $region62: #{tpu_custom_call.1} parent=5 // pred_check_branch
        %921 = sbr.rel (%p919) target = $region64
      $region63: #{tpu_custom_call.1} parent=5 // pred_region
        %s922 = ssub.s32 %s18, 2
        // Predicated region
        $region65: #{tpu_custom_call.1} parent=63 // pred_check
          %p923 = pneg %p241
        $region66: #{tpu_custom_call.1} parent=63 // pred_check_branch
          %925 = sbr.rel (%p923) target = $region68
        $region67: #{tpu_custom_call.1} parent=63 // pred_region
          %s926 = sand.u32 %s226, 1
          %s927 = scalar_lea.sflag [#allocation3], %s926
          %s928 = sand.u32 %s226, 1
          %s929 = smul.addr %s928, 8
          %s930 = scalar_lea.vmem [#allocation2], %s929
          %932 = dma.done %s927, 128
        $region68: #{tpu_custom_call.1} parent=63 // pred_fallthru
          _
      $region64: #{tpu_custom_call.1} parent=5 // pred_fallthru
        _
    $region6: #{tpu_custom_call.1} parent=1 // loop_footer
      %s22 = sadd.s32 1, %s18
    $region7: #{tpu_custom_call.1} parent=1 // loop_footer_branch
      %17 = sbr.rel target = $region3
    $region8: #{tpu_custom_call.1} parent=1 // loop_exit
      _
    %933 = vsyncpa [#allocation3], 1
    %s934 = scalar_lea.sflag [#allocation3], 1
    %935 = vsyncpa %s934, 1

</llo_original>
